<compile_context>
chip_gen: v7x
topology: tpu7x:2x2x1
jax: 0.10.0
libtpu: 0.0.40
codegen_flags: <defaults>
</compile_context>

<pallas_src>
import functools
import math

import jax
import jax.numpy as jnp
from jax.experimental import pallas as pl
from jax.experimental.pallas import tpu as pltpu


def _cdiv(a, b):
    return -(-a // b)


def _round_up(x, m):
    return _cdiv(x, m) * m


def _afd_sums_kernel(fm_s_ref, fm_t_ref,
                     out_t_ref, out_ss_ref, out_tt_ref, out_st_ref,
                     acc_t, acc_ss, acc_tt, acc_st,
                     *, c, lane_w, full_groups, ragged_groups, n_split, n_k):
    """Accumulate per-channel Σt, Σs², Σt², Σs·t for one (split, batch) pair.

    Accumulation stays per-lane in (C, lane_w) f32 scratch; the single cross-lane
    reduction + (C, 1) store happen only at the last spatial tile (finalize)."""
    k = pl.program_id(2)

    @pl.when(k == 0)
    def _():
        acc_t[...] = jnp.zeros_like(acc_t)
        acc_ss[...] = jnp.zeros_like(acc_ss)
        acc_tt[...] = jnp.zeros_like(acc_tt)
        acc_st[...] = jnp.zeros_like(acc_st)

    def accumulate(groups):
        # groups: static tuple of (lane offset within the tile, number of valid lanes).
        zero = jnp.zeros((c, lane_w), jnp.float32)
        p_t, p_ss, p_tt, p_st = zero, zero, zero, zero
        for off, n_valid in groups:
            sj = fm_s_ref[0, :, pl.ds(off, lane_w)].astype(jnp.float32)
            tj = fm_t_ref[0, :, pl.ds(off, lane_w)].astype(jnp.float32)
            if n_valid < lane_w:
                lane = jax.lax.broadcasted_iota(jnp.int32, (1, lane_w), 1)
                keep = lane < n_valid
                sj = jnp.where(keep, sj, 0.0)
                tj = jnp.where(keep, tj, 0.0)
            p_t = p_t + tj
            p_ss = p_ss + sj * sj
            p_tt = p_tt + tj * tj
            p_st = p_st + sj * tj
        acc_t[...] += p_t
        acc_ss[...] += p_ss
        acc_tt[...] += p_tt
        acc_st[...] += p_st

    if ragged_groups is None:
        accumulate(full_groups)
    else:
        # Only the very last grid tile (last split, last k) can be ragged; its start
        # offset is statically known, so the masked group list is static too.
        is_ragged = jnp.logical_and(pl.program_id(0) == n_split - 1, k == n_k - 1)

        @pl.when(jnp.logical_not(is_ragged))
        def _():
            accumulate(full_groups)

        @pl.when(is_ragged)
        def _():
            accumulate(ragged_groups)

    @pl.when(k == n_k - 1)
    def _():
        out_t_ref[0, 0] = jnp.sum(acc_t[...], axis=1, keepdims=True)
        out_ss_ref[0, 0] = jnp.sum(acc_ss[...], axis=1, keepdims=True)
        out_tt_ref[0, 0] = jnp.sum(acc_tt[...], axis=1, keepdims=True)
        out_st_ref[0, 0] = jnp.sum(acc_st[...], axis=1, keepdims=True)


def _vmem_budgets():
    """(feature-tile budget, scoped vmem limit) chosen per TPU generation."""
    try:
        cap = pltpu.get_tpu_info().vmem_capacity_bytes
    except Exception:
        cap = 64 * 1024 * 1024  # conservative (v7x-sized) fallback
    if cap >= 96 * 1024 * 1024:          # v5e / v6e: 128 MiB physical VMEM
        return 24 * 1024 * 1024, 64 * 1024 * 1024
    # v7x: 64 MiB physical VMEM -> smaller feature tiles, headroom for pipelining.
    return 16 * 1024 * 1024, 48 * 1024 * 1024


def afd_loss(fm_s, fm_t, w1, b1, w2, b2, eps=1e-6, hw_tile=None, n_split=None):
    """Pallas implementation of AFD.forward(fm_s, fm_t)."""
    B, C, H, W = fm_s.shape
    HW = H * W
    itemsize = jnp.dtype(fm_s.dtype).itemsize

    # No-copy reshape; feature maps stay in their incoming HBM dtype.
    fm_s2 = fm_s.reshape(B, C, HW)
    fm_t2 = fm_t.reshape(B, C, HW)

    tile_budget, vmem_limit = _vmem_budgets()

    # ---- choose split count and spatial tile ------------------------------------
    if HW < 128:
        n_split, hw_tile, lane_w = 1, HW, HW           # single full-extent tile
    else:
        lane_w = 128
        if n_split is None:
            n_split = 2 if HW >= 256 else 1            # keep both v7x TCs busy
        max_tile = (HW // 128) * 128                   # never exceed the real extent
        per_split_pad = _round_up(_cdiv(HW, n_split), 128)
        if hw_tile is None:
            # 2 tensors x 2 pipeline buffers x C x tile x itemsize <= budget
            cap = max(128, (tile_budget // (4 * C * itemsize)) // 128 * 128)
            # keep each per-channel contiguous HBM run >= ~1 KiB
            floor = _round_up(max(256, 1024 // itemsize), 128)
            hw_tile = min(cap, per_split_pad)
            hw_tile = max(hw_tile, floor)
            hw_tile = min(hw_tile, per_split_pad, max_tile)
            hw_tile = max(hw_tile, 128)
        else:
            hw_tile = max(128, min((hw_tile // 128) * 128, max_tile))

    n_k = _cdiv(_cdiv(HW, n_split), hw_tile)
    # Safety: no split may start past the real extent (would be a fully-OOB block).
    while n_split > 1 and (n_split - 1) * n_k * hw_tile >= HW:
        n_split -= 1
        n_k = _cdiv(_cdiv(HW, n_split), hw_tile)
    coverage = n_split * n_k * hw_tile

    n_groups = hw_tile // lane_w
    full_groups = tuple((j * lane_w, lane_w) for j in range(n_groups))
    ragged_groups = None
    if coverage > HW:
        last_start = coverage - hw_tile                # start of the only ragged tile
        ragged_groups = tuple(
            (j * lane_w, min(lane_w, HW - (last_start + j * lane_w)))
            for j in range(n_groups)
            if last_start + j * lane_w < HW)

    kernel = functools.partial(
        _afd_sums_kernel, c=C, lane_w=lane_w,
        full_groups=full_groups, ragged_groups=ragged_groups,
        n_split=n_split, n_k=n_k)

    in_spec = pl.BlockSpec((1, C, hw_tile), lambda s, b, k: (b, 0, s * n_k + k))
    out_spec = pl.BlockSpec((1, 1, C, 1), lambda s, b, k: (s, b, 0, 0))
    out_sds = jax.ShapeDtypeStruct((n_split, B, C, 1), jnp.float32)

    cost = pl.CostEstimate(
        flops=8 * B * C * HW,
        transcendentals=0,
        bytes_accessed=2 * B * C * HW * itemsize + 4 * n_split * B * C * 4)

    # NOTE: if profiling shows exposed DMA at large C with modest hw_tile, the two
    # feature-map specs can be given pipeline_mode=pl.Buffered(3) (kept at the
    # default double-buffering here to stay inside the v7x VMEM budget).
    sums = pl.pallas_call(
        kernel,
        out_shape=(out_sds,) * 4,
        grid_spec=pltpu.PrefetchScalarGridSpec(
            num_scalar_prefetch=0,
            grid=(n_split, B, n_k),                    # reduction axis last
            in_specs=[in_spec, in_spec],
            out_specs=[out_spec] * 4,
            scratch_shapes=[pltpu.VMEM((C, lane_w), jnp.float32)] * 4),
        compiler_params=pltpu.CompilerParams(
            dimension_semantics=("parallel", "parallel", "arbitrary"),
            vmem_limit_bytes=vmem_limit),
        cost_estimate=cost,
    )(fm_s2, fm_t2)

    # ---- tiny finalize math on (B, C) slabs in plain JAX -------------------------
    sum_t, sum_ss, sum_tt, sum_st = (x.sum(axis=0)[..., 0] for x in sums)   # (B, C)

    inv_hw = 1.0 / HW
    pooled = sum_t * inv_hw                                # adaptive_avg_pool2d(fm_t, 1)
    ns = jnp.sqrt(sum_ss) + eps                            # ||s|| + eps
    nt = jnp.sqrt(sum_tt) + eps                            # ||t|| + eps
    # mean_HW((s/ns - t/nt)^2) via the running sums.
    msq = (sum_ss / (ns * ns) - 2.0 * sum_st / (ns * nt) + sum_tt / (nt * nt)) * inv_hw

    hidden = jax.nn.relu(pooled @ w1.astype(jnp.float32).T + b1.astype(jnp.float32))
    rho = jax.nn.sigmoid(hidden @ w2.astype(jnp.float32).T + b2.astype(jnp.float32))
    rho = rho / jnp.sum(rho, axis=1, keepdims=True)
    return jnp.mean(jnp.sum(rho * msq, axis=1))


def afd_reference(fm_s, fm_t, w1, b1, w2, b2, eps=1e-6):
    """Pure-JAX reference mirroring the PyTorch forward."""
    pooled = jnp.mean(fm_t, axis=(2, 3))                          # (B, C)
    hidden = jax.nn.relu(pooled @ w1.T + b1)                      # (B, mid)
    rho = jax.nn.sigmoid(hidden @ w2.T + b2)                      # (B, C)
    rho = rho / jnp.sum(rho, axis=1, keepdims=True)
    ns = jnp.sqrt(jnp.sum(fm_s * fm_s, axis=(2, 3), keepdims=True))
    nt = jnp.sqrt(jnp.sum(fm_t * fm_t, axis=(2, 3), keepdims=True))
    diff = fm_s / (ns + eps) - fm_t / (nt + eps)
    loss = rho * jnp.mean(diff * diff, axis=(2, 3))               # (B, C)
    return jnp.mean(jnp.sum(loss, axis=1))


if __name__ == "__main__":
    # Small shapes consistent with the module: B=2, C=4, H=W=16, att_f=0.5.
    B, C, H, W = 2, 4, 16, 16
    att_f = 0.5
    mid = int(C * att_f)

    key = jax.random.PRNGKey(0)
    k_s, k_t, k_w1, k_w2, k_s2, k_t2 = jax.random.split(key, 6)

    fm_s = jax.random.normal(k_s, (B, C, H, W), dtype=jnp.float32)
    fm_t = jax.random.normal(k_t, (B, C, H, W), dtype=jnp.float32)

    # Kaiming normal (mode='fan_out', relu) for 1x1 convs: std = sqrt(2 / out_channels)
    w1 = jax.random.normal(k_w1, (mid, C), dtype=jnp.float32) * math.sqrt(2.0 / mid)
    b1 = jnp.zeros((mid,), dtype=jnp.float32)
    w2 = jax.random.normal(k_w2, (C, mid), dtype=jnp.float32) * math.sqrt(2.0 / C)
    b2 = jnp.zeros((C,), dtype=jnp.float32)

    # 1) default config: HW=256 -> 2-way split axis (keeps both v7x TCs busy).
    loss = jax.block_until_ready(afd_loss(fm_s, fm_t, w1, b1, w2, b2))
    ref = jax.block_until_ready(afd_reference(fm_s, fm_t, w1, b1, w2, b2))
    assert jnp.allclose(loss, ref, rtol=1e-4, atol=1e-5), ("default", loss, ref)

    # 2) no split, two 128-lane tiles: exercises the k-axis accumulator init/finalize.
    loss2 = jax.block_until_ready(
        afd_loss(fm_s, fm_t, w1, b1, w2, b2, hw_tile=128, n_split=1))
    assert jnp.allclose(loss2, ref, rtol=1e-4, atol=1e-5), ("multi-k", loss2, ref)

    # 3) non-128-multiple spatial size (H*W=300): exercises the in-kernel masked
    #    ragged tail (partial-mask group + fully skipped group), no wrapper padding.
    H3, W3 = 15, 20
    fm_s3 = jax.random.normal(k_s2, (B, C, H3, W3), dtype=jnp.float32)
    fm_t3 = jax.random.normal(k_t2, (B, C, H3, W3), dtype=jnp.float32)
    loss3 = jax.block_until_ready(afd_loss(fm_s3, fm_t3, w1, b1, w2, b2))
    ref3 = jax.block_until_ready(afd_reference(fm_s3, fm_t3, w1, b1, w2, b2))
    assert jnp.allclose(loss3, ref3, rtol=1e-4, atol=1e-5), ("ragged", loss3, ref3)

    # 4) bf16 feature maps (cast to f32 per 128-lane slice inside the kernel).
    fm_s_bf = fm_s.astype(jnp.bfloat16)
    fm_t_bf = fm_t.astype(jnp.bfloat16)
    loss4 = jax.block_until_ready(afd_loss(fm_s_bf, fm_t_bf, w1, b1, w2, b2))
    ref4 = jax.block_until_ready(afd_reference(
        fm_s_bf.astype(jnp.float32), fm_t_bf.astype(jnp.float32), w1, b1, w2, b2))
    assert jnp.allclose(loss4, ref4, rtol=1e-3, atol=1e-4), ("bf16", loss4, ref4)

    print("KERNEL_OK")
</pallas_src>

<mosaic_0001>
module attributes {stable_mosaic.version = 11 : i64} {
  func.func @_afd_sums_kernel(%arg0: i32, %arg1: i32, %arg2: i32, %arg3: memref<1x4x128xf32, #tpu.memory_space<vmem>>, %arg4: memref<1x4x128xf32, #tpu.memory_space<vmem>>, %arg5: memref<1x1x4x1xf32, #tpu.memory_space<vmem>>, %arg6: memref<1x1x4x1xf32, #tpu.memory_space<vmem>>, %arg7: memref<1x1x4x1xf32, #tpu.memory_space<vmem>>, %arg8: memref<1x1x4x1xf32, #tpu.memory_space<vmem>>, %arg9: memref<4x128xf32, #tpu.memory_space<vmem>>, %arg10: memref<4x128xf32, #tpu.memory_space<vmem>>, %arg11: memref<4x128xf32, #tpu.memory_space<vmem>>, %arg12: memref<4x128xf32, #tpu.memory_space<vmem>>) attributes {dimension_semantics = [#tpu.dimension_semantics<parallel>, #tpu.dimension_semantics<parallel>, #tpu.dimension_semantics<arbitrary>], iteration_bounds = array<i64: 2, 2, 1>, scalar_prefetch = 0 : i64, scratch_operands = 4 : i64, tpu.core_type = #tpu.core_type<tc>, window_params = [{transform_indices = @transform_0, window_bounds = array<i64: 1, 4, 128>}, {transform_indices = @transform_1, window_bounds = array<i64: 1, 4, 128>}, {transform_indices = @transform_2, window_bounds = array<i64: 1, 1, 4, 1>}, {transform_indices = @transform_3, window_bounds = array<i64: 1, 1, 4, 1>}, {transform_indices = @transform_4, window_bounds = array<i64: 1, 1, 4, 1>}, {transform_indices = @transform_5, window_bounds = array<i64: 1, 1, 4, 1>}]} {
    %c0_i32 = arith.constant 0 : i32
    %0 = arith.cmpi eq, %arg2, %c0_i32 : i32
    %1 = arith.extui %0 : i1 to i32
    %c0_i32_0 = arith.constant 0 : i32
    %2 = arith.cmpi ne, %1, %c0_i32_0 : i32
    scf.if %2 {
      %cst_24 = arith.constant 0.000000e+00 : f32
      %30 = vector.broadcast %cst_24 : f32 to vector<4x128xf32>
      %c0_25 = arith.constant 0 : index
      %c0_26 = arith.constant 0 : index
      %31 = vector.load %arg9[%c0_25, %c0_26] : memref<4x128xf32, #tpu.memory_space<vmem>>, vector<4x128xf32>
      tpu.vector_store %arg9[%c0_25, %c0_26], %30 {strides = array<i32>} : memref<4x128xf32, #tpu.memory_space<vmem>>, vector<4x128xf32>,
      %cst_27 = arith.constant 0.000000e+00 : f32
      %32 = vector.broadcast %cst_27 : f32 to vector<4x128xf32>
      %c0_28 = arith.constant 0 : index
      %c0_29 = arith.constant 0 : index
      %33 = vector.load %arg10[%c0_28, %c0_29] : memref<4x128xf32, #tpu.memory_space<vmem>>, vector<4x128xf32>
      tpu.vector_store %arg10[%c0_28, %c0_29], %32 {strides = array<i32>} : memref<4x128xf32, #tpu.memory_space<vmem>>, vector<4x128xf32>,
      %cst_30 = arith.constant 0.000000e+00 : f32
      %34 = vector.broadcast %cst_30 : f32 to vector<4x128xf32>
      %c0_31 = arith.constant 0 : index
      %c0_32 = arith.constant 0 : index
      %35 = vector.load %arg11[%c0_31, %c0_32] : memref<4x128xf32, #tpu.memory_space<vmem>>, vector<4x128xf32>
      tpu.vector_store %arg11[%c0_31, %c0_32], %34 {strides = array<i32>} : memref<4x128xf32, #tpu.memory_space<vmem>>, vector<4x128xf32>,
      %cst_33 = arith.constant 0.000000e+00 : f32
      %36 = vector.broadcast %cst_33 : f32 to vector<4x128xf32>
      %c0_34 = arith.constant 0 : index
      %c0_35 = arith.constant 0 : index
      %37 = vector.load %arg12[%c0_34, %c0_35] : memref<4x128xf32, #tpu.memory_space<vmem>>, vector<4x128xf32>
      tpu.vector_store %arg12[%c0_34, %c0_35], %36 {strides = array<i32>} : memref<4x128xf32, #tpu.memory_space<vmem>>, vector<4x128xf32>,
    } else {
    }
    %cst = arith.constant 0.000000e+00 : f32
    %3 = vector.broadcast %cst : f32 to vector<4x128xf32>
    %c0 = arith.constant 0 : index
    %c0_1 = arith.constant 0 : index
    %c0_2 = arith.constant 0 : index
    %4 = vector.load %arg3[%c0, %c0_1, %c0_2] : memref<1x4x128xf32, #tpu.memory_space<vmem>>, vector<1x4x128xf32>
    %5 = vector.shape_cast %4 : vector<1x4x128xf32> to vector<4x128xf32>
    %c0_3 = arith.constant 0 : index
    %c0_4 = arith.constant 0 : index
    %c0_5 = arith.constant 0 : index
    %6 = vector.load %arg4[%c0_3, %c0_4, %c0_5] : memref<1x4x128xf32, #tpu.memory_space<vmem>>, vector<1x4x128xf32>
    %7 = vector.shape_cast %6 : vector<1x4x128xf32> to vector<4x128xf32>
    %8 = arith.addf %3, %7 : vector<4x128xf32>
    %9 = arith.mulf %5, %5 : vector<4x128xf32>
    %10 = arith.addf %3, %9 : vector<4x128xf32>
    %11 = arith.mulf %7, %7 : vector<4x128xf32>
    %12 = arith.addf %3, %11 : vector<4x128xf32>
    %13 = arith.mulf %5, %7 : vector<4x128xf32>
    %14 = arith.addf %3, %13 : vector<4x128xf32>
    %c0_6 = arith.constant 0 : index
    %c0_7 = arith.constant 0 : index
    %15 = vector.load %arg9[%c0_6, %c0_7] : memref<4x128xf32, #tpu.memory_space<vmem>>, vector<4x128xf32>
    %16 = arith.addf %15, %8 : vector<4x128xf32>
    %c0_8 = arith.constant 0 : index
    %c0_9 = arith.constant 0 : index
    %17 = vector.load %arg9[%c0_8, %c0_9] : memref<4x128xf32, #tpu.memory_space<vmem>>, vector<4x128xf32>
    tpu.vector_store %arg9[%c0_8, %c0_9], %16 {strides = array<i32>} : memref<4x128xf32, #tpu.memory_space<vmem>>, vector<4x128xf32>,
    %c0_10 = arith.constant 0 : index
    %c0_11 = arith.constant 0 : index
    %18 = vector.load %arg10[%c0_10, %c0_11] : memref<4x128xf32, #tpu.memory_space<vmem>>, vector<4x128xf32>
    %19 = arith.addf %18, %10 : vector<4x128xf32>
    %c0_12 = arith.constant 0 : index
    %c0_13 = arith.constant 0 : index
    %20 = vector.load %arg10[%c0_12, %c0_13] : memref<4x128xf32, #tpu.memory_space<vmem>>, vector<4x128xf32>
    tpu.vector_store %arg10[%c0_12, %c0_13], %19 {strides = array<i32>} : memref<4x128xf32, #tpu.memory_space<vmem>>, vector<4x128xf32>,
    %c0_14 = arith.constant 0 : index
    %c0_15 = arith.constant 0 : index
    %21 = vector.load %arg11[%c0_14, %c0_15] : memref<4x128xf32, #tpu.memory_space<vmem>>, vector<4x128xf32>
    %22 = arith.addf %21, %12 : vector<4x128xf32>
    %c0_16 = arith.constant 0 : index
    %c0_17 = arith.constant 0 : index
    %23 = vector.load %arg11[%c0_16, %c0_17] : memref<4x128xf32, #tpu.memory_space<vmem>>, vector<4x128xf32>
    tpu.vector_store %arg11[%c0_16, %c0_17], %22 {strides = array<i32>} : memref<4x128xf32, #tpu.memory_space<vmem>>, vector<4x128xf32>,
    %c0_18 = arith.constant 0 : index
    %c0_19 = arith.constant 0 : index
    %24 = vector.load %arg12[%c0_18, %c0_19] : memref<4x128xf32, #tpu.memory_space<vmem>>, vector<4x128xf32>
    %25 = arith.addf %24, %14 : vector<4x128xf32>
    %c0_20 = arith.constant 0 : index
    %c0_21 = arith.constant 0 : index
    %26 = vector.load %arg12[%c0_20, %c0_21] : memref<4x128xf32, #tpu.memory_space<vmem>>, vector<4x128xf32>
    tpu.vector_store %arg12[%c0_20, %c0_21], %25 {strides = array<i32>} : memref<4x128xf32, #tpu.memory_space<vmem>>, vector<4x128xf32>,
    %c0_i32_22 = arith.constant 0 : i32
    %27 = arith.cmpi eq, %arg2, %c0_i32_22 : i32
    %28 = arith.extui %27 : i1 to i32
    %c0_i32_23 = arith.constant 0 : i32
    %29 = arith.cmpi ne, %28, %c0_i32_23 : i32
    scf.if %29 {
      %c0_24 = arith.constant 0 : index
      %c0_25 = arith.constant 0 : index
      %30 = vector.load %arg9[%c0_24, %c0_25] : memref<4x128xf32, #tpu.memory_space<vmem>>, vector<4x128xf32>
      %cst_26 = arith.constant dense<0.000000e+00> : vector<4xf32>
      %31 = vector.multi_reduction <add>, %30, %cst_26 [1] : vector<4x128xf32> to vector<4xf32>
      %32 = vector.shape_cast %31 : vector<4xf32> to vector<4x1xf32>
      %c0_27 = arith.constant 0 : index
      %c0_28 = arith.constant 0 : index
      %c0_29 = arith.constant 0 : index
      %c0_30 = arith.constant 0 : index
      %33 = vector.load %arg5[%c0_27, %c0_28, %c0_29, %c0_30] : memref<1x1x4x1xf32, #tpu.memory_space<vmem>>, vector<1x1x4x1xf32>
      %34 = vector.shape_cast %33 : vector<1x1x4x1xf32> to vector<4x1xf32>
      %35 = vector.shape_cast %32 : vector<4x1xf32> to vector<1x1x4x1xf32>
      tpu.vector_store %arg5[%c0_27, %c0_28, %c0_29, %c0_30], %35 {strides = array<i32>} : memref<1x1x4x1xf32, #tpu.memory_space<vmem>>, vector<1x1x4x1xf32>,
      %c0_31 = arith.constant 0 : index
      %c0_32 = arith.constant 0 : index
      %36 = vector.load %arg10[%c0_31, %c0_32] : memref<4x128xf32, #tpu.memory_space<vmem>>, vector<4x128xf32>
      %cst_33 = arith.constant dense<0.000000e+00> : vector<4xf32>
      %37 = vector.multi_reduction <add>, %36, %cst_33 [1] : vector<4x128xf32> to vector<4xf32>
      %38 = vector.shape_cast %37 : vector<4xf32> to vector<4x1xf32>
      %c0_34 = arith.constant 0 : index
      %c0_35 = arith.constant 0 : index
      %c0_36 = arith.constant 0 : index
      %c0_37 = arith.constant 0 : index
      %39 = vector.load %arg6[%c0_34, %c0_35, %c0_36, %c0_37] : memref<1x1x4x1xf32, #tpu.memory_space<vmem>>, vector<1x1x4x1xf32>
      %40 = vector.shape_cast %39 : vector<1x1x4x1xf32> to vector<4x1xf32>
      %41 = vector.shape_cast %38 : vector<4x1xf32> to vector<1x1x4x1xf32>
      tpu.vector_store %arg6[%c0_34, %c0_35, %c0_36, %c0_37], %41 {strides = array<i32>} : memref<1x1x4x1xf32, #tpu.memory_space<vmem>>, vector<1x1x4x1xf32>,
      %c0_38 = arith.constant 0 : index
      %c0_39 = arith.constant 0 : index
      %42 = vector.load %arg11[%c0_38, %c0_39] : memref<4x128xf32, #tpu.memory_space<vmem>>, vector<4x128xf32>
      %cst_40 = arith.constant dense<0.000000e+00> : vector<4xf32>
      %43 = vector.multi_reduction <add>, %42, %cst_40 [1] : vector<4x128xf32> to vector<4xf32>
      %44 = vector.shape_cast %43 : vector<4xf32> to vector<4x1xf32>
      %c0_41 = arith.constant 0 : index
      %c0_42 = arith.constant 0 : index
      %c0_43 = arith.constant 0 : index
      %c0_44 = arith.constant 0 : index
      %45 = vector.load %arg7[%c0_41, %c0_42, %c0_43, %c0_44] : memref<1x1x4x1xf32, #tpu.memory_space<vmem>>, vector<1x1x4x1xf32>
      %46 = vector.shape_cast %45 : vector<1x1x4x1xf32> to vector<4x1xf32>
      %47 = vector.shape_cast %44 : vector<4x1xf32> to vector<1x1x4x1xf32>
      tpu.vector_store %arg7[%c0_41, %c0_42, %c0_43, %c0_44], %47 {strides = array<i32>} : memref<1x1x4x1xf32, #tpu.memory_space<vmem>>, vector<1x1x4x1xf32>,
      %c0_45 = arith.constant 0 : index
      %c0_46 = arith.constant 0 : index
      %48 = vector.load %arg12[%c0_45, %c0_46] : memref<4x128xf32, #tpu.memory_space<vmem>>, vector<4x128xf32>
      %cst_47 = arith.constant dense<0.000000e+00> : vector<4xf32>
      %49 = vector.multi_reduction <add>, %48, %cst_47 [1] : vector<4x128xf32> to vector<4xf32>
      %50 = vector.shape_cast %49 : vector<4xf32> to vector<4x1xf32>
      %c0_48 = arith.constant 0 : index
      %c0_49 = arith.constant 0 : index
      %c0_50 = arith.constant 0 : index
      %c0_51 = arith.constant 0 : index
      %51 = vector.load %arg8[%c0_48, %c0_49, %c0_50, %c0_51] : memref<1x1x4x1xf32, #tpu.memory_space<vmem>>, vector<1x1x4x1xf32>
      %52 = vector.shape_cast %51 : vector<1x1x4x1xf32> to vector<4x1xf32>
      %53 = vector.shape_cast %50 : vector<4x1xf32> to vector<1x1x4x1xf32>
      tpu.vector_store %arg8[%c0_48, %c0_49, %c0_50, %c0_51], %53 {strides = array<i32>} : memref<1x1x4x1xf32, #tpu.memory_space<vmem>>, vector<1x1x4x1xf32>,
    } else {
    }
    return
  }
  func.func @transform_0(%arg0: i32, %arg1: i32, %arg2: i32) -> (i32, i32, i32) {
    %c1_i32 = arith.constant 1 : i32
    %0 = arith.muli %arg0, %c1_i32 : i32
    %1 = arith.addi %0, %arg2 : i32
    %c0_i32 = arith.constant 0 : i32
    %c0_i32_0 = arith.constant 0 : i32
    return %arg1, %c0_i32, %1 : i32, i32, i32
  }
  func.func @transform_1(%arg0: i32, %arg1: i32, %arg2: i32) -> (i32, i32, i32) {
    %c1_i32 = arith.constant 1 : i32
    %0 = arith.muli %arg0, %c1_i32 : i32
    %1 = arith.addi %0, %arg2 : i32
    %c0_i32 = arith.constant 0 : i32
    %c0_i32_0 = arith.constant 0 : i32
    return %arg1, %c0_i32, %1 : i32, i32, i32
  }
  func.func @transform_2(%arg0: i32, %arg1: i32, %arg2: i32) -> (i32, i32, i32, i32) {
    %c0_i32 = arith.constant 0 : i32
    %c0_i32_0 = arith.constant 0 : i32
    %c0_i32_1 = arith.constant 0 : i32
    return %arg0, %arg1, %c0_i32, %c0_i32_0 : i32, i32, i32, i32
  }
  func.func @transform_3(%arg0: i32, %arg1: i32, %arg2: i32) -> (i32, i32, i32, i32) {
    %c0_i32 = arith.constant 0 : i32
    %c0_i32_0 = arith.constant 0 : i32
    %c0_i32_1 = arith.constant 0 : i32
    return %arg0, %arg1, %c0_i32, %c0_i32_0 : i32, i32, i32, i32
  }
  func.func @transform_4(%arg0: i32, %arg1: i32, %arg2: i32) -> (i32, i32, i32, i32) {
    %c0_i32 = arith.constant 0 : i32
    %c0_i32_0 = arith.constant 0 : i32
    %c0_i32_1 = arith.constant 0 : i32
    return %arg0, %arg1, %c0_i32, %c0_i32_0 : i32, i32, i32, i32
  }
  func.func @transform_5(%arg0: i32, %arg1: i32, %arg2: i32) -> (i32, i32, i32, i32) {
    %c0_i32 = arith.constant 0 : i32
    %c0_i32_0 = arith.constant 0 : i32
    %c0_i32_1 = arith.constant 0 : i32
    return %arg0, %arg1, %c0_i32, %c0_i32_0 : i32, i32, i32, i32
  }
}

</mosaic_0001>

<llo_original>
// kernel: tpu_custom_call.1
$region0: #{tpu_custom_call.1}
  #allocation0 [shape = 'u32[]', space=smem, size = 0x4, offset = 0x4, fixed_abs, tag = 'smem constant byte address 0x4 - core index']
  #allocation1 [shape = 'u32[144,128]{1,0:T(1,128)}', space=vmem, size = 0x12000, scoped, tag = 'internal scratch']
  #allocation2 [shape = 'f32[4,128]{1,0:T(4,128)}', space=vmem, size = 0x800, scoped, tag = 'scratch operand']
  #allocation3 [shape = 'f32[4,128]{1,0:T(4,128)}', space=vmem, size = 0x800, scoped, tag = 'scratch operand']
  #allocation4 [shape = 'f32[4,128]{1,0:T(4,128)}', space=vmem, size = 0x800, scoped, tag = 'scratch operand']
  #allocation5 [shape = 'f32[4,128]{1,0:T(4,128)}', space=vmem, size = 0x800, scoped, tag = 'scratch operand']
  %s0 = inlined_call_operand.hbm [shape: f32[2,4,256], index: 0, kind: input, shape index: {}]
  %s1 = inlined_call_operand.hbm [shape: f32[2,4,256], index: 1, kind: input, shape index: {}]
  %s2 = inlined_call_operand.vmem [shape: f32[2,2,4,1], index: 2, kind: output, shape index: {0}]
  %s3 = inlined_call_operand.vmem [shape: f32[2,2,4,1], index: 3, kind: output, shape index: {1}]
  %s4 = inlined_call_operand.vmem [shape: f32[2,2,4,1], index: 4, kind: output, shape index: {2}]
  %s5 = inlined_call_operand.vmem [shape: f32[2,2,4,1], index: 5, kind: output, shape index: {3}]
  %6 = xla_tuple %s2, %s3, %s4, %s5
  %s7 = sld [smem:[#allocation0]]
  $region81: #{tpu_custom_call.1} parent=0
    _
  %s9 = ssub.s32 1, %s7
  %s10 = scalar_select 0, %s9, %s7
  $region1: #{tpu_custom_call.1} parent=0
    #allocation6 [shape = 'u8[4096]{0}', space=vmem, size = 0x1000, scoped, tag = 'input window, operand 0']
    #allocation7 [shape = 's32[2]{0}', space=sflag, size = 0x8, scoped, tag = 'scoped memory for tpu_custom_call.1']
    #allocation8 [shape = 'u8[4096]{0}', space=vmem, size = 0x1000, scoped, tag = 'input window, operand 1']
    #allocation9 [shape = 's32[2]{0}', space=sflag, size = 0x8, scoped, tag = 'scoped memory for tpu_custom_call.1']
    %11 = vsyncpa [#allocation7], 0
    %s12 = scalar_lea.sflag [#allocation7], 1
    %13 = vsyncpa %s12, 0
    %14 = vsyncpa [#allocation9], 0
    %s15 = scalar_lea.sflag [#allocation9], 1
    %16 = vsyncpa %s15, 0
    loop: start=0, step=1, limit=6
    $region2: #{tpu_custom_call.1} parent=1 // loop_pre_header
      _
    $region3: #{tpu_custom_call.1} parent=1 // loop_header
      %s18 = sphi 0, %s22
      %p19 = scmp.ge.s32.totalorder %s18, 6
      %s25 = sphi 0, %s44
      %s26 = sphi 0, %s40
      %s27 = sphi 0, %s36
      %s28 = sphi 0, %s25
      %s29 = sphi 0, %s26
      %s30 = sphi 0, %s27
      %s31 = sphi 0, %s28
      %s32 = sphi 0, %s29
      %s33 = sphi 0, %s30
      %s51 = sphi 0, %s53
      %s54 = sphi 0, %s51
      %s55 = sphi 0, %s54
      %s71 = sphi 0, %s55
      %s81 = sphi 0, %s83
      %s84 = sphi 0, %s81
      %s85 = sphi 0, %s84
      %s101 = sphi 0, %s85
      %s109 = sphi 0, %s111
      %s112 = sphi 0, %s109
      %s113 = sphi 0, %s112
      %s129 = sphi 0, %s113
      %s137 = sphi 0, %s139
      %s140 = sphi 0, %s137
      %s141 = sphi 0, %s140
      %s157 = sphi 0, %s141
      %s165 = sphi 0, %s167
      %s168 = sphi 0, %s165
      %s169 = sphi 0, %s168
      %s185 = sphi 0, %s169
      %s193 = sphi 0, %s195
      %s196 = sphi 0, %s193
      %s197 = sphi 0, %s196
      %s213 = sphi 0, %s197
    $region4: #{tpu_custom_call.1} parent=1 // loop_header_branch
      %21 = sbr.rel (%p19) target = $region8
    $region5: #{tpu_custom_call.1} parent=1 // loop_body
      %s23 = ssub.s32 %s18, 1
      %s24 = ssub.s32 %s18, 2
      %s34 = sadd.s32 1, %s27
      %p35 = scmp.ge.s32.totalorder %s34, 1
      %s36 = scalar_select %p35, 0, %s34
      %s37 = sadd.s32 1, %s26
      %s38 = scalar_select %p35, %s37, %s26
      %p39 = scmp.ge.s32.totalorder %s38, 2
      %s40 = scalar_select %p39, 0, %s38
      %s41 = sadd.s32 1, %s25
      %s42 = scalar_select %p39, %s41, %s25
      %p43 = scmp.ge.s32.totalorder %s42, 2
      %s44 = scalar_select %p43, 0, %s42
      %s45 = sadd.s32 %s25, %s27
      %s46 = sadd.s32 %s44, %s36
      %s47 = ssub.s32 %s26, %s40
      %s48 = ssub.s32 %s45, %s46
      %s49 = sor.u32 %s47, %s48
      %p50 = scmp.eq.s32.totalorder %s49, 0
      %s52 = sadd.s32 %s51, 1
      %s53 = scalar_select %p50, %s51, %s52
      %p56 = pneg %p50
      %p57 = scmp.eq.s32.totalorder %s18, 3
      %p58 = por %p56, %p57
      %p59 = scmp.ne.s32.totalorder %s51, %s54
      %p60 = scmp.eq.s32.totalorder %s18, 0
      %p61 = por %p59, %p60
      %p62 = scmp.ne.s32.totalorder %s51, %s54
      %p63 = scmp.eq.s32.totalorder %s23, 3
      %p64 = por %p62, %p63
      %p65 = scmp.ne.s32.totalorder %s54, %s55
      %p66 = scmp.eq.s32.totalorder %s23, 0
      %p67 = por %p65, %p66
      %p68 = scmp.ne.s32.totalorder %s54, %s55
      %p69 = scmp.eq.s32.totalorder %s24, 3
      %p70 = por %p68, %p69
      %p72 = scmp.ne.s32.totalorder %s55, %s71
      %p73 = scmp.eq.s32.totalorder %s24, 0
      %p74 = por %p72, %p73
      %s75 = sadd.s32 %s25, %s27
      %s76 = sadd.s32 %s44, %s36
      %s77 = ssub.s32 %s26, %s40
      %s78 = ssub.s32 %s75, %s76
      %s79 = sor.u32 %s77, %s78
      %p80 = scmp.eq.s32.totalorder %s79, 0
      %s82 = sadd.s32 %s81, 1
      %s83 = scalar_select %p80, %s81, %s82
      %p86 = pneg %p80
      %p87 = scmp.eq.s32.totalorder %s18, 3
      %p88 = por %p86, %p87
      %p89 = scmp.ne.s32.totalorder %s81, %s84
      %p90 = scmp.eq.s32.totalorder %s18, 0
      %p91 = por %p89, %p90
      %p92 = scmp.ne.s32.totalorder %s81, %s84
      %p93 = scmp.eq.s32.totalorder %s23, 3
      %p94 = por %p92, %p93
      %p95 = scmp.ne.s32.totalorder %s84, %s85
      %p96 = scmp.eq.s32.totalorder %s23, 0
      %p97 = por %p95, %p96
      %p98 = scmp.ne.s32.totalorder %s84, %s85
      %p99 = scmp.eq.s32.totalorder %s24, 3
      %p100 = por %p98, %p99
      %p102 = scmp.ne.s32.totalorder %s85, %s101
      %p103 = scmp.eq.s32.totalorder %s24, 0
      %p104 = por %p102, %p103
      %s105 = ssub.s32 %s25, %s44
      %s106 = ssub.s32 %s26, %s40
      %s107 = sor.u32 %s105, %s106
      %p108 = scmp.eq.s32.totalorder %s107, 0
      %s110 = sadd.s32 %s109, 1
      %s111 = scalar_select %p108, %s109, %s110
      %p114 = pneg %p108
      %p115 = scmp.eq.s32.totalorder %s18, 3
      %p116 = por %p114, %p115
      %p117 = scmp.ne.s32.totalorder %s109, %s112
      %p118 = scmp.eq.s32.totalorder %s18, 0
      %p119 = por %p117, %p118
      %p120 = scmp.ne.s32.totalorder %s109, %s112
      %p121 = scmp.eq.s32.totalorder %s23, 3
      %p122 = por %p120, %p121
      %p123 = scmp.ne.s32.totalorder %s112, %s113
      %p124 = scmp.eq.s32.totalorder %s23, 0
      %p125 = por %p123, %p124
      %p126 = scmp.ne.s32.totalorder %s112, %s113
      %p127 = scmp.eq.s32.totalorder %s24, 3
      %p128 = por %p126, %p127
      %p130 = scmp.ne.s32.totalorder %s113, %s129
      %p131 = scmp.eq.s32.totalorder %s24, 0
      %p132 = por %p130, %p131
      %s133 = ssub.s32 %s25, %s44
      %s134 = ssub.s32 %s26, %s40
      %s135 = sor.u32 %s133, %s134
      %p136 = scmp.eq.s32.totalorder %s135, 0
      %s138 = sadd.s32 %s137, 1
      %s139 = scalar_select %p136, %s137, %s138
      %p142 = pneg %p136
      %p143 = scmp.eq.s32.totalorder %s18, 3
      %p144 = por %p142, %p143
      %p145 = scmp.ne.s32.totalorder %s137, %s140
      %p146 = scmp.eq.s32.totalorder %s18, 0
      %p147 = por %p145, %p146
      %p148 = scmp.ne.s32.totalorder %s137, %s140
      %p149 = scmp.eq.s32.totalorder %s23, 3
      %p150 = por %p148, %p149
      %p151 = scmp.ne.s32.totalorder %s140, %s141
      %p152 = scmp.eq.s32.totalorder %s23, 0
      %p153 = por %p151, %p152
      %p154 = scmp.ne.s32.totalorder %s140, %s141
      %p155 = scmp.eq.s32.totalorder %s24, 3
      %p156 = por %p154, %p155
      %p158 = scmp.ne.s32.totalorder %s141, %s157
      %p159 = scmp.eq.s32.totalorder %s24, 0
      %p160 = por %p158, %p159
      %s161 = ssub.s32 %s25, %s44
      %s162 = ssub.s32 %s26, %s40
      %s163 = sor.u32 %s161, %s162
      %p164 = scmp.eq.s32.totalorder %s163, 0
      %s166 = sadd.s32 %s165, 1
      %s167 = scalar_select %p164, %s165, %s166
      %p170 = pneg %p164
      %p171 = scmp.eq.s32.totalorder %s18, 3
      %p172 = por %p170, %p171
      %p173 = scmp.ne.s32.totalorder %s165, %s168
      %p174 = scmp.eq.s32.totalorder %s18, 0
      %p175 = por %p173, %p174
      %p176 = scmp.ne.s32.totalorder %s165, %s168
      %p177 = scmp.eq.s32.totalorder %s23, 3
      %p178 = por %p176, %p177
      %p179 = scmp.ne.s32.totalorder %s168, %s169
      %p180 = scmp.eq.s32.totalorder %s23, 0
      %p181 = por %p179, %p180
      %p182 = scmp.ne.s32.totalorder %s168, %s169
      %p183 = scmp.eq.s32.totalorder %s24, 3
      %p184 = por %p182, %p183
      %p186 = scmp.ne.s32.totalorder %s169, %s185
      %p187 = scmp.eq.s32.totalorder %s24, 0
      %p188 = por %p186, %p187
      %s189 = ssub.s32 %s25, %s44
      %s190 = ssub.s32 %s26, %s40
      %s191 = sor.u32 %s189, %s190
      %p192 = scmp.eq.s32.totalorder %s191, 0
      %s194 = sadd.s32 %s193, 1
      %s195 = scalar_select %p192, %s193, %s194
      %p198 = pneg %p192
      %p199 = scmp.eq.s32.totalorder %s18, 3
      %p200 = por %p198, %p199
      %p201 = scmp.ne.s32.totalorder %s193, %s196
      %p202 = scmp.eq.s32.totalorder %s18, 0
      %p203 = por %p201, %p202
      %p204 = scmp.ne.s32.totalorder %s193, %s196
      %p205 = scmp.eq.s32.totalorder %s23, 3
      %p206 = por %p204, %p205
      %p207 = scmp.ne.s32.totalorder %s196, %s197
      %p208 = scmp.eq.s32.totalorder %s23, 0
      %p209 = por %p207, %p208
      %p210 = scmp.ne.s32.totalorder %s196, %s197
      %p211 = scmp.eq.s32.totalorder %s24, 3
      %p212 = por %p210, %p211
      %p214 = scmp.ne.s32.totalorder %s197, %s213
      %p215 = scmp.eq.s32.totalorder %s24, 0
      %p216 = por %p214, %p215
      %p217 = scmp.le.s32.totalorder 1, %s18
      %p218 = scmp.lt.s32.totalorder %s18, 5
      %p219 = pnand %p217, %p218
      %p220 = pneg %p219
      // Predicated region
      $region9: #{tpu_custom_call.1} parent=5 // pred_check
        _
      $region10: #{tpu_custom_call.1} parent=5 // pred_check_branch
        %222 = sbr.rel (%p219) target = $region12
      $region11: #{tpu_custom_call.1} parent=5 // pred_region
        %s223 = ssub.s32 %s18, 1
      $region12: #{tpu_custom_call.1} parent=5 // pred_fallthru
        _
      %p224 = scmp.lt.s32.totalorder %s18, 4
      // Predicated region
      $region13: #{tpu_custom_call.1} parent=5 // pred_check
        %p225 = pneg %p224
      $region14: #{tpu_custom_call.1} parent=5 // pred_check_branch
        %227 = sbr.rel (%p225) target = $region16
      $region15: #{tpu_custom_call.1} parent=5 // pred_region
        // Predicated region
        $region17: #{tpu_custom_call.1} parent=15 // pred_check
          %p228 = pneg %p61
        $region18: #{tpu_custom_call.1} parent=15 // pred_check_branch
          %230 = sbr.rel (%p228) target = $region20
        $region19: #{tpu_custom_call.1} parent=15 // pred_region
          %s231 = sand.u32 %s51, 1
          %s232 = scalar_lea.sflag [#allocation7], %s231
          %s233 = sand.u32 %s51, 1
          %s234 = smul.addr %s233, 4
          %s235 = scalar_lea.vmem [#allocation6], %s234
          %s236 = sadd.s32 %s25, %s27
          %s238 = ssub.s32 64, 64
          %239 = vsyncadd %s232, %s238
          %s240 = smul.addr %s26, 2
          %s241 = sadd.s32 %s236, %s240
          %s242 = smul.addr %s241, 64
          %s243 = scalar_lea.hbm %s0, %s242
          %s245 = sshll.u32 %s235, 4
          %s246 = int_to_ptr.vmem [resolvable:$true] %s245
          %248 = dma.hbm_to_vmem [thread:$0]  %s243, 64, %s246, %s232
        $region20: #{tpu_custom_call.1} parent=15 // pred_fallthru
          _
        // Predicated region
        $region21: #{tpu_custom_call.1} parent=15 // pred_check
          %p249 = pneg %p91
        $region22: #{tpu_custom_call.1} parent=15 // pred_check_branch
          %251 = sbr.rel (%p249) target = $region24
        $region23: #{tpu_custom_call.1} parent=15 // pred_region
          %s252 = sand.u32 %s81, 1
          %s253 = scalar_lea.sflag [#allocation9], %s252
          %s254 = sand.u32 %s81, 1
          %s255 = smul.addr %s254, 4
          %s256 = scalar_lea.vmem [#allocation8], %s255
          %s257 = sadd.s32 %s25, %s27
          %s259 = ssub.s32 64, 64
          %260 = vsyncadd %s253, %s259
          %s261 = smul.addr %s26, 2
          %s262 = sadd.s32 %s257, %s261
          %s263 = smul.addr %s262, 64
          %s264 = scalar_lea.hbm %s1, %s263
          %s266 = sshll.u32 %s256, 4
          %s267 = int_to_ptr.vmem [resolvable:$true] %s266
          %269 = dma.hbm_to_vmem [thread:$0]  %s264, 64, %s267, %s253
        $region24: #{tpu_custom_call.1} parent=15 // pred_fallthru
          _
      $region16: #{tpu_custom_call.1} parent=5 // pred_fallthru
        _
      %p270 = scmp.le.s32.totalorder 1, %s18
      %p271 = scmp.lt.s32.totalorder %s18, 5
      %p272 = pnand %p270, %p271
      %p273 = pneg %p272
      // Predicated region
      $region25: #{tpu_custom_call.1} parent=5 // pred_check
        _
      $region26: #{tpu_custom_call.1} parent=5 // pred_check_branch
        %275 = sbr.rel (%p272) target = $region28
      $region27: #{tpu_custom_call.1} parent=5 // pred_region
        %s276 = ssub.s32 %s18, 1
        %s277 = sand.u32 %s54, 1
        %s278 = scalar_lea.sflag [#allocation7], %s277
        %s279 = sand.u32 %s54, 1
        %s280 = smul.addr %s279, 4
        %s281 = scalar_lea.vmem [#allocation6], %s280
        // Predicated region
        $region29: #{tpu_custom_call.1} parent=27 // pred_check
          %p282 = pneg %p67
        $region30: #{tpu_custom_call.1} parent=27 // pred_check_branch
          %284 = sbr.rel (%p282) target = $region32
        $region31: #{tpu_custom_call.1} parent=27 // pred_region
          %285 = dma.done %s278, 64
        $region32: #{tpu_custom_call.1} parent=27 // pred_fallthru
          _
        %s286 = sand.u32 %s84, 1
        %s287 = scalar_lea.sflag [#allocation9], %s286
        %s288 = sand.u32 %s84, 1
        %s289 = smul.addr %s288, 4
        %s290 = scalar_lea.vmem [#allocation8], %s289
        // Predicated region
        $region33: #{tpu_custom_call.1} parent=27 // pred_check
          %p291 = pneg %p97
        $region34: #{tpu_custom_call.1} parent=27 // pred_check_branch
          %293 = sbr.rel (%p291) target = $region36
        $region35: #{tpu_custom_call.1} parent=27 // pred_region
          %294 = dma.done %s287, 64
        $region36: #{tpu_custom_call.1} parent=27 // pred_fallthru
          _
        %s295 = sand.u32 %s54, 1
        %s296 = scalar_lea.sflag [#allocation7], %s295
        %s297 = sand.u32 %s54, 1
        %s298 = smul.addr %s297, 4
        %s299 = scalar_lea.vmem [#allocation6], %s298
        %p300 = pneg %p67
        %p301 = pneg %p64
        %s302 = sand.u32 %s84, 1
        %s303 = scalar_lea.sflag [#allocation9], %s302
        %s304 = sand.u32 %s84, 1
        %s305 = smul.addr %s304, 4
        %s306 = scalar_lea.vmem [#allocation8], %s305
        %p307 = pneg %p97
        %p308 = pneg %p94
        %p309 = pneg %p125
        %p310 = pneg %p122
        %p311 = scmp.lt.s32.totalorder %s28, 1
        %s312 = scalar_select %p311, %s28, 1
        %p313 = scmp.lt.s32.totalorder %s29, 1
        %s314 = scalar_select %p313, %s29, 1
        %s315 = smul.addr %s312, 2
        %s316 = sadd.s32 %s314, %s315
        %s317 = smul.addr %s316, 4
        %s318 = scalar_lea.vmem %s2, %s317
        %p319 = pneg %p153
        %p320 = pneg %p150
        %p321 = scmp.lt.s32.totalorder %s28, 1
        %s322 = scalar_select %p321, %s28, 1
        %p323 = scmp.lt.s32.totalorder %s29, 1
        %s324 = scalar_select %p323, %s29, 1
        %s325 = smul.addr %s322, 2
        %s326 = sadd.s32 %s324, %s325
        %s327 = smul.addr %s326, 4
        %s328 = scalar_lea.vmem %s3, %s327
        %p329 = pneg %p181
        %p330 = pneg %p178
        %p331 = scmp.lt.s32.totalorder %s28, 1
        %s332 = scalar_select %p331, %s28, 1
        %p333 = scmp.lt.s32.totalorder %s29, 1
        %s334 = scalar_select %p333, %s29, 1
        %s335 = smul.addr %s332, 2
        %s336 = sadd.s32 %s334, %s335
        %s337 = smul.addr %s336, 4
        %s338 = scalar_lea.vmem %s4, %s337
        %p339 = pneg %p209
        %p340 = pneg %p206
        %p341 = scmp.lt.s32.totalorder %s28, 1
        %s342 = scalar_select %p341, %s28, 1
        %p343 = scmp.lt.s32.totalorder %s29, 1
        %s344 = scalar_select %p343, %s29, 1
        %s345 = smul.addr %s342, 2
        %s346 = sadd.s32 %s344, %s345
        %s347 = smul.addr %s346, 4
        %s348 = scalar_lea.vmem %s5, %s347
        %s349 = sadd.s32 %s28, %s30
        %s350 = sadd.s32 %s28, %s30
        %p351 = scmp.lt.s32.totalorder %s28, 1
        %s352 = scalar_select %p351, %s28, 1
        %p353 = scmp.lt.s32.totalorder %s29, 1
        %s354 = scalar_select %p353, %s29, 1
        %s355 = smul.addr %s352, 2
        %s356 = sadd.s32 %s354, %s355
        %s357 = smul.addr %s356, 4
        %s358 = scalar_lea.vmem %s2, %s357
        %p359 = scmp.lt.s32.totalorder %s28, 1
        %s360 = scalar_select %p359, %s28, 1
        %p361 = scmp.lt.s32.totalorder %s29, 1
        %s362 = scalar_select %p361, %s29, 1
        %s363 = smul.addr %s360, 2
        %s364 = sadd.s32 %s362, %s363
        %s365 = smul.addr %s364, 4
        %s366 = scalar_lea.vmem %s3, %s365
        %p367 = scmp.lt.s32.totalorder %s28, 1
        %s368 = scalar_select %p367, %s28, 1
        %p369 = scmp.lt.s32.totalorder %s29, 1
        %s370 = scalar_select %p369, %s29, 1
        %s371 = smul.addr %s368, 2
        %s372 = sadd.s32 %s370, %s371
        %s373 = smul.addr %s372, 4
        %s374 = scalar_lea.vmem %s4, %s373
        %p375 = scmp.lt.s32.totalorder %s28, 1
        %s376 = scalar_select %p375, %s28, 1
        %p377 = scmp.lt.s32.totalorder %s29, 1
        %s378 = scalar_select %p377, %s29, 1
        %s379 = smul.addr %s376, 2
        %s380 = sadd.s32 %s378, %s379
        %s381 = smul.addr %s380, 4
        %s382 = scalar_lea.vmem %s5, %s381
        %p383 = scmp.eq.s32.totalorder %s30, 0
        // Predicated region
        $region37: #{tpu_custom_call.1} parent=27 // pred_check
          %p384 = pneg %p383
        $region38: #{tpu_custom_call.1} parent=27 // pred_check_branch
          %386 = sbr.rel (%p384) target = $region40
        $region39: #{tpu_custom_call.1} parent=27 // pred_region
          %387 = vst [vmem:[#allocation2] sm:$0xf] 0.0
          %388 = vst [vmem:[#allocation3] sm:$0xf] 0.0
          %389 = vst [vmem:[#allocation4] sm:$0xf] 0.0
          %390 = vst [vmem:[#allocation5] sm:$0xf] 0.0
        $region40: #{tpu_custom_call.1} parent=27 // pred_fallthru
          _
        %v391 = vld [vmem:[%s281] sm:$0xf]
        %v392 = vld [vmem:[%s290] sm:$0xf]
        %v393 = vadd.f32 %v392, 0.0
        %v394 = vmul.f32 %v391, %v391
        %v395 = vadd.f32 %v394, 0.0
        %v396 = vmul.f32 %v392, %v392
        %v397 = vadd.f32 %v396, 0.0
        %v398 = vmul.f32 %v391, %v392
        %v399 = vadd.f32 %v398, 0.0
        %v400 = vld [vmem:[#allocation2] sm:$0xf]
        %v401 = vadd.f32 %v400, %v393
        %402 = vst [vmem:[#allocation2] sm:$0xf] %v401
        %v403 = vld [vmem:[#allocation3] sm:$0xf]
        %v404 = vadd.f32 %v403, %v395
        %405 = vst [vmem:[#allocation3] sm:$0xf] %v404
        %v406 = vld [vmem:[#allocation4] sm:$0xf]
        %v407 = vadd.f32 %v406, %v397
        %408 = vst [vmem:[#allocation4] sm:$0xf] %v407
        %v409 = vld [vmem:[#allocation5] sm:$0xf]
        %v410 = vadd.f32 %v409, %v399
        %411 = vst [vmem:[#allocation5] sm:$0xf] %v410
        // Predicated region
        $region41: #{tpu_custom_call.1} parent=27 // pred_check
          %p412 = pneg %p383
        $region42: #{tpu_custom_call.1} parent=27 // pred_check_branch
          %414 = sbr.rel (%p412) target = $region44
        $region43: #{tpu_custom_call.1} parent=27 // pred_region
          %v415 = vld [vmem:[#allocation2] sm:$0xf]
          %vm416 = vcmask 1043456
          %v417 = vsel %vm416, %v415, 0.0
          %418 = vadd.xlane.f32.xlu0 %v417
          %v419 = vpop.xlane.xlu0 %418
          %vm420 = vcmask 3072
          %421 = vst.msk [vmem:[%s358] sm:$0xf] %vm420, %v419
          %v422 = vld [vmem:[#allocation3] sm:$0xf]
          %v423 = vsel %vm416, %v422, 0.0
          %424 = vadd.xlane.f32.xlu0 %v423
          %v425 = vpop.xlane.xlu0 %424
          %426 = vst.msk [vmem:[%s366] sm:$0xf] %vm420, %v425
          %v427 = vld [vmem:[#allocation4] sm:$0xf]
          %v428 = vsel %vm416, %v427, 0.0
          %429 = vadd.xlane.f32.xlu0 %v428
          %v430 = vpop.xlane.xlu0 %429
          %431 = vst.msk [vmem:[%s374] sm:$0xf] %vm420, %v430
          %v432 = vld [vmem:[#allocation5] sm:$0xf]
          %v433 = vsel %vm416, %v432, 0.0
          %434 = vadd.xlane.f32.xlu0 %v433
          %v435 = vpop.xlane.xlu0 %434
          %436 = vst.msk [vmem:[%s382] sm:$0xf] %vm420, %v435
        $region44: #{tpu_custom_call.1} parent=27 // pred_fallthru
          _
        %p437 = scmp.lt.s32.totalorder %s28, 1
        %s438 = scalar_select %p437, %s28, 1
        %p439 = scmp.lt.s32.totalorder %s29, 1
        %s440 = scalar_select %p439, %s29, 1
        %s441 = smul.addr %s438, 2
        %s442 = sadd.s32 %s440, %s441
        %s443 = smul.addr %s442, 4
        %s444 = scalar_lea.vmem %s2, %s443
        %p445 = scmp.lt.s32.totalorder %s28, 1
        %s446 = scalar_select %p445, %s28, 1
        %p447 = scmp.lt.s32.totalorder %s29, 1
        %s448 = scalar_select %p447, %s29, 1
        %s449 = smul.addr %s446, 2
        %s450 = sadd.s32 %s448, %s449
        %s451 = smul.addr %s450, 4
        %s452 = scalar_lea.vmem %s3, %s451
        %p453 = scmp.lt.s32.totalorder %s28, 1
        %s454 = scalar_select %p453, %s28, 1
        %p455 = scmp.lt.s32.totalorder %s29, 1
        %s456 = scalar_select %p455, %s29, 1
        %s457 = smul.addr %s454, 2
        %s458 = sadd.s32 %s456, %s457
        %s459 = smul.addr %s458, 4
        %s460 = scalar_lea.vmem %s4, %s459
        %p461 = scmp.lt.s32.totalorder %s28, 1
        %s462 = scalar_select %p461, %s28, 1
        %p463 = scmp.lt.s32.totalorder %s29, 1
        %s464 = scalar_select %p463, %s29, 1
        %s465 = smul.addr %s462, 2
        %s466 = sadd.s32 %s464, %s465
        %s467 = smul.addr %s466, 4
        %s468 = scalar_lea.vmem %s5, %s467
        // Predicated region
        $region45: #{tpu_custom_call.1} parent=27 // pred_check
          %p469 = pneg %p122
        $region46: #{tpu_custom_call.1} parent=27 // pred_check_branch
          %471 = sbr.rel (%p469) target = $region48
        $region47: #{tpu_custom_call.1} parent=27 // pred_region
          _
        $region48: #{tpu_custom_call.1} parent=27 // pred_fallthru
          _
        // Predicated region
        $region49: #{tpu_custom_call.1} parent=27 // pred_check
          %p472 = pneg %p150
        $region50: #{tpu_custom_call.1} parent=27 // pred_check_branch
          %474 = sbr.rel (%p472) target = $region52
        $region51: #{tpu_custom_call.1} parent=27 // pred_region
          _
        $region52: #{tpu_custom_call.1} parent=27 // pred_fallthru
          _
        // Predicated region
        $region53: #{tpu_custom_call.1} parent=27 // pred_check
          %p475 = pneg %p178
        $region54: #{tpu_custom_call.1} parent=27 // pred_check_branch
          %477 = sbr.rel (%p475) target = $region56
        $region55: #{tpu_custom_call.1} parent=27 // pred_region
          _
        $region56: #{tpu_custom_call.1} parent=27 // pred_fallthru
          _
        // Predicated region
        $region57: #{tpu_custom_call.1} parent=27 // pred_check
          %p478 = pneg %p206
        $region58: #{tpu_custom_call.1} parent=27 // pred_check_branch
          %480 = sbr.rel (%p478) target = $region60
        $region59: #{tpu_custom_call.1} parent=27 // pred_region
          _
        $region60: #{tpu_custom_call.1} parent=27 // pred_fallthru
          _
      $region28: #{tpu_custom_call.1} parent=5 // pred_fallthru
        _
      %p481 = scmp.le.s32.totalorder 2, %s18
      // Predicated region
      $region61: #{tpu_custom_call.1} parent=5 // pred_check
        %p482 = pneg %p481
      $region62: #{tpu_custom_call.1} parent=5 // pred_check_branch
        %484 = sbr.rel (%p482) target = $region64
      $region63: #{tpu_custom_call.1} parent=5 // pred_region
        %s485 = ssub.s32 %s18, 2
        // Predicated region
        $region65: #{tpu_custom_call.1} parent=63 // pred_check
          %p486 = pneg %p128
        $region66: #{tpu_custom_call.1} parent=63 // pred_check_branch
          %488 = sbr.rel (%p486) target = $region68
        $region67: #{tpu_custom_call.1} parent=63 // pred_region
          %p489 = scmp.lt.s32.totalorder %s31, 1
          %s490 = scalar_select %p489, %s31, 1
          %p491 = scmp.lt.s32.totalorder %s32, 1
          %s492 = scalar_select %p491, %s32, 1
          %s493 = smul.addr %s490, 2
          %s494 = sadd.s32 %s492, %s493
          %s495 = smul.addr %s494, 4
          %s496 = scalar_lea.vmem %s2, %s495
        $region68: #{tpu_custom_call.1} parent=63 // pred_fallthru
          _
        // Predicated region
        $region69: #{tpu_custom_call.1} parent=63 // pred_check
          %p497 = pneg %p156
        $region70: #{tpu_custom_call.1} parent=63 // pred_check_branch
          %499 = sbr.rel (%p497) target = $region72
        $region71: #{tpu_custom_call.1} parent=63 // pred_region
          %p500 = scmp.lt.s32.totalorder %s31, 1
          %s501 = scalar_select %p500, %s31, 1
          %p502 = scmp.lt.s32.totalorder %s32, 1
          %s503 = scalar_select %p502, %s32, 1
          %s504 = smul.addr %s501, 2
          %s505 = sadd.s32 %s503, %s504
          %s506 = smul.addr %s505, 4
          %s507 = scalar_lea.vmem %s3, %s506
        $region72: #{tpu_custom_call.1} parent=63 // pred_fallthru
          _
        // Predicated region
        $region73: #{tpu_custom_call.1} parent=63 // pred_check
          %p508 = pneg %p184
        $region74: #{tpu_custom_call.1} parent=63 // pred_check_branch
          %510 = sbr.rel (%p508) target = $region76
        $region75: #{tpu_custom_call.1} parent=63 // pred_region
          %p511 = scmp.lt.s32.totalorder %s31, 1
          %s512 = scalar_select %p511, %s31, 1
          %p513 = scmp.lt.s32.totalorder %s32, 1
          %s514 = scalar_select %p513, %s32, 1
          %s515 = smul.addr %s512, 2
          %s516 = sadd.s32 %s514, %s515
          %s517 = smul.addr %s516, 4
          %s518 = scalar_lea.vmem %s4, %s517
        $region76: #{tpu_custom_call.1} parent=63 // pred_fallthru
          _
        // Predicated region
        $region77: #{tpu_custom_call.1} parent=63 // pred_check
          %p519 = pneg %p212
        $region78: #{tpu_custom_call.1} parent=63 // pred_check_branch
          %521 = sbr.rel (%p519) target = $region80
        $region79: #{tpu_custom_call.1} parent=63 // pred_region
          %p522 = scmp.lt.s32.totalorder %s31, 1
          %s523 = scalar_select %p522, %s31, 1
          %p524 = scmp.lt.s32.totalorder %s32, 1
          %s525 = scalar_select %p524, %s32, 1
          %s526 = smul.addr %s523, 2
          %s527 = sadd.s32 %s525, %s526
          %s528 = smul.addr %s527, 4
          %s529 = scalar_lea.vmem %s5, %s528
        $region80: #{tpu_custom_call.1} parent=63 // pred_fallthru
          _
      $region64: #{tpu_custom_call.1} parent=5 // pred_fallthru
        _
    $region6: #{tpu_custom_call.1} parent=1 // loop_footer
      %s22 = sadd.s32 1, %s18
    $region7: #{tpu_custom_call.1} parent=1 // loop_footer_branch
      %17 = sbr.rel target = $region3
    $region8: #{tpu_custom_call.1} parent=1 // loop_exit
      _
    %530 = vsyncpa [#allocation7], 1
    %s531 = scalar_lea.sflag [#allocation7], 1
    %532 = vsyncpa %s531, 1
    %533 = vsyncpa [#allocation9], 1
    %s534 = scalar_lea.sflag [#allocation9], 1
    %535 = vsyncpa %s534, 1

</llo_original>
